<compile_context>
chip_gen: v7x
topology: tpu7x:2x2x1
jax: 0.10.0
libtpu: 0.0.40
codegen_flags: <defaults>
</compile_context>

<pallas_src>
import functools

import jax
import jax.numpy as jnp
from jax.experimental import pallas as pl
from jax.experimental.pallas import tpu as pltpu


def _round_up(x: int, m: int) -> int:
    return ((x + m - 1) // m) * m


def _cdiv(a: int, b: int) -> int:
    return -(-a // b)


# ----------------------------- kernel body ---------------------------------


def _fused_hypernet_kernel(x_ref, w_ref, b_ref, o_ref):
    """One MXU matmul per lane tile; f32 bias add on the VPU (exact)."""
    acc = jnp.dot(x_ref[...], w_ref[0], preferred_element_type=jnp.float32)
    o_ref[...] = (acc + b_ref[...]).astype(o_ref.dtype)


# ------------------------ one-time preprocessing ----------------------------


def _choose_tiling(n_total, block_n, e, batch_hint, w_itemsize,
                   vmem_budget=24 * 1024 * 1024):
    """Pick the lane-tile width blk_n (multiple of 128) and the grid length."""
    n128 = _round_up(n_total, 128)
    b_pad = max(8, _round_up(batch_hint, 8))
    # VMEM bytes consumed per lane of blk_n: double-buffered weight tile,
    # double-buffered f32 output tile, bias tile.
    per_lane = 2 * e * w_itemsize + 2 * b_pad * 4 + 2 * 8 * 4
    cap = max(128, min((max(block_n, 128) // 128) * 128,
                       max(128, (vmem_budget // per_lane) // 128 * 128),
                       n128))
    # Prefer a grid of >= 2 steps (pipelined weight stream; both v7x TCs).
    if n128 >= 256:
        cap = min(cap, max(128, _round_up(_cdiv(n128, 2), 128)))
    blk = cap
    while blk > 128:
        waste = _cdiv(n128, blk) * blk - n128
        if waste * 8 <= n128:        # <= 12.5% padded lanes in the tail block
            break
        blk -= 128
    return blk, _cdiv(n128, blk)


def prepare_fused_params(params, *, block_n=2048, batch_hint=8,
                         weight_dtype=jnp.float32):
    """One-time preprocessing.  Run at parameter-load time, NOT per call.

    params: dict with keys
      'w_dw' (E, input_dim*hidden_dim), 'b_dw' (1, input_dim*hidden_dim)
      'w_db' (E, hidden_dim),           'b_db' (1, hidden_dim)
      'w_uw' (E, hidden_dim*output_dim),'b_uw' (1, hidden_dim*output_dim)
      'w_ub' (E, output_dim),           'b_ub' (1, output_dim)

    Returns a dict holding the pre-tiled fused weight (num_blocks, E, blk_n)
    in `weight_dtype`, the f32 bias row (1, n_pad), and the split sizes.
    """
    ws = (params['w_dw'], params['w_db'], params['w_uw'], params['w_ub'])
    bs = (params['b_dw'], params['b_db'], params['b_uw'], params['b_ub'])
    sizes = tuple(int(w.shape[1]) for w in ws)
    e = int(ws[0].shape[0])
    n_total = sum(sizes)

    w_itemsize = jnp.dtype(weight_dtype).itemsize
    blk_n, num_blocks = _choose_tiling(n_total, block_n, e, batch_hint,
                                       w_itemsize)
    n_pad = blk_n * num_blocks

    # Fused weight, padded to n_pad lanes, contiguous per-block layout.
    w_fused = jnp.concatenate([w.astype(weight_dtype) for w in ws], axis=1)
    w_pad = jnp.zeros((e, n_pad), weight_dtype).at[:, :n_total].set(w_fused)
    w_tiled = w_pad.reshape(e, num_blocks, blk_n).transpose(1, 0, 2)
    w_tiled = jax.device_put(w_tiled)          # materialize contiguous blocks

    # Bias stays in f32 (added after the matmul -> exact for any weight dtype).
    b_fused = jnp.concatenate([b.reshape(1, -1) for b in bs],
                              axis=1).astype(jnp.float32)
    bias = jnp.zeros((1, n_pad), jnp.float32).at[:, :n_total].set(b_fused)

    return dict(w_tiled=w_tiled, bias=bias, sizes=sizes)


# ------------------------------- per call -----------------------------------


@functools.partial(jax.jit, static_argnames=("sizes",))
def _hypernet_apply(embedding, w_tiled, bias, *, sizes):
    num_blocks, e, blk_n = w_tiled.shape
    n_pad = num_blocks * blk_n
    n_total = sum(sizes)
    B = embedding.shape[0]
    b_pad = max(8, _round_up(B, 8))

    x = embedding.astype(w_tiled.dtype)
    if b_pad != B:
        x = jnp.zeros((b_pad, e), w_tiled.dtype).at[:B, :].set(x)

    w_bytes = jnp.dtype(w_tiled.dtype).itemsize
    vmem_est = (2 * e * blk_n * w_bytes          # weight double buffers
                + 2 * b_pad * blk_n * 4          # f32 output double buffers
                + 2 * 8 * blk_n * 4              # bias tiles
                + 2 * b_pad * _round_up(e, 128) * w_bytes)  # resident x
    vmem_limit = int(min(max(vmem_est + (8 << 20), 16 << 20), 56 << 20))

    out = pl.pallas_call(
        _fused_hypernet_kernel,
        out_shape=jax.ShapeDtypeStruct((b_pad, n_pad), jnp.float32),
        grid=(num_blocks,),
        in_specs=[
            pl.BlockSpec((b_pad, e), lambda j: (0, 0)),        # x: resident
            pl.BlockSpec((1, e, blk_n), lambda j: (j, 0, 0)),  # contiguous W tile
            pl.BlockSpec((1, blk_n), lambda j: (0, j)),        # f32 bias tile
        ],
        out_specs=pl.BlockSpec((b_pad, blk_n), lambda j: (0, j)),
        compiler_params=pltpu.CompilerParams(
            dimension_semantics=("parallel",),
            vmem_limit_bytes=vmem_limit,
        ),
    )(x, w_tiled, bias)

    # Un-pad and split back into the four module outputs.
    out = out[:B, :n_total]
    o0 = sizes[0]
    o1 = o0 + sizes[1]
    o2 = o1 + sizes[2]
    return out[:, :o0], out[:, o0:o1], out[:, o1:o2], out[:, o2:]


def meta_prefix_hypernet_matmul(embedding, fused_params):
    """JAX/Pallas equivalent of MetaPrefixEncoderHyperNetMatMul.forward.

    embedding: (B, E) float32.
    fused_params: output of prepare_fused_params (built once per weight set).
    Returns (down_weight, down_bias, up_weight, up_bias), each (B, out) f32.
    """
    return _hypernet_apply(embedding, fused_params['w_tiled'],
                           fused_params['bias'], sizes=fused_params['sizes'])


# ------------------------------ param init ----------------------------------


def init_params(key, embedding_dim, input_dim, hidden_dim, output_dim):
    """Deterministic synthetic init (uniform, roughly matching nn.Linear scale)."""
    keys = jax.random.split(key, 8)

    def linear(kw, kb, in_f, out_f):
        bound = 1.0 / jnp.sqrt(in_f)
        # Stored as (in_f, out_f) == PyTorch weight.T  -> y = x @ W + b
        w = jax.random.uniform(kw, (in_f, out_f), jnp.float32, -bound, bound)
        b = jax.random.uniform(kb, (1, out_f), jnp.float32, -bound, bound)
        return w, b

    w_dw, b_dw = linear(keys[0], keys[1], embedding_dim, input_dim * hidden_dim)
    w_db, b_db = linear(keys[2], keys[3], embedding_dim, hidden_dim)
    w_uw, b_uw = linear(keys[4], keys[5], embedding_dim, hidden_dim * output_dim)
    w_ub, b_ub = linear(keys[6], keys[7], embedding_dim, output_dim)
    return dict(w_dw=w_dw, b_dw=b_dw, w_db=w_db, b_db=b_db,
                w_uw=w_uw, b_uw=b_uw, w_ub=w_ub, b_ub=b_ub)


if __name__ == "__main__":
    # Small config consistent with the module's __init__ kwargs.
    B = 2
    embedding_dim = 32
    input_dim = 16
    hidden_dim = 8
    output_dim = 16

    key = jax.random.PRNGKey(0)
    k_emb, k_params = jax.random.split(key)
    embedding = jax.random.normal(k_emb, (B, embedding_dim), jnp.float32)
    params = init_params(k_params, embedding_dim, input_dim, hidden_dim,
                         output_dim)

    # One-time preprocessing (parameter-load time; NOT in the per-call path).
    fused_f32 = prepare_fused_params(params, batch_hint=B)

    # Exact (float32) path.
    outs = jax.block_until_ready(meta_prefix_hypernet_matmul(embedding,
                                                             fused_f32))

    # Pure-JAX reference (same semantics as the four nn.Linear calls).
    refs = (
        embedding @ params['w_dw'] + params['b_dw'],
        embedding @ params['w_db'] + params['b_db'],
        embedding @ params['w_uw'] + params['b_uw'],
        embedding @ params['w_ub'] + params['b_ub'],
    )
    for o, r in zip(outs, refs):
        assert o.shape == r.shape and o.dtype == r.dtype
        assert jnp.allclose(o, r, atol=1e-5, rtol=1e-5)

    # bf16-weight path (halves weight HBM traffic; bias still added in f32).
    fused_bf16 = prepare_fused_params(params, batch_hint=B,
                                      weight_dtype=jnp.bfloat16)
    outs_bf16 = jax.block_until_ready(meta_prefix_hypernet_matmul(embedding,
                                                                  fused_bf16))
    for o, r in zip(outs_bf16, refs):
        assert o.shape == r.shape
        assert jnp.allclose(o, r, atol=1e-1, rtol=1e-1)

    # TODO(synk): int8 (v5e/v6e) / fp8-e4m3 (v7x) weight paths with per-column
    # scales are a further 2x HBM saving; not implemented here.
    print("KERNEL_OK")
</pallas_src>

<mosaic_0001>
module attributes {stable_mosaic.version = 11 : i64} {
  func.func @_fused_hypernet_kernel(%arg0: i32, %arg1: memref<8x32xf32, #tpu.memory_space<vmem>>, %arg2: memref<1x32x128xf32, #tpu.memory_space<vmem>>, %arg3: memref<1x128xf32, #tpu.memory_space<vmem>>, %arg4: memref<8x128xf32, #tpu.memory_space<vmem>>) attributes {dimension_semantics = [#tpu.dimension_semantics<parallel>], iteration_bounds = array<i64: 3>, scalar_prefetch = 0 : i64, scratch_operands = 0 : i64, tpu.core_type = #tpu.core_type<tc>, window_params = [{pipeline_mode = #tpu.pipeline_mode<synchronous>, transform_indices = @transform_0, window_bounds = array<i64: 8, 32>}, {transform_indices = @transform_1, window_bounds = array<i64: 1, 32, 128>}, {transform_indices = @transform_2, window_bounds = array<i64: 1, 128>}, {transform_indices = @transform_3, window_bounds = array<i64: 8, 128>}]} {
    %c0 = arith.constant 0 : index
    %c0_0 = arith.constant 0 : index
    %0 = vector.load %arg1[%c0, %c0_0] : memref<8x32xf32, #tpu.memory_space<vmem>>, vector<8x32xf32>
    %c0_1 = arith.constant 0 : index
    %c0_2 = arith.constant 0 : index
    %c0_3 = arith.constant 0 : index
    %1 = vector.load %arg2[%c0_1, %c0_2, %c0_3] : memref<1x32x128xf32, #tpu.memory_space<vmem>>, vector<1x32x128xf32>
    %2 = vector.shape_cast %1 : vector<1x32x128xf32> to vector<32x128xf32>
    %cst = arith.constant dense<0.000000e+00> : vector<8x128xf32>
    %3 = tpu.matmul %0, %2, %cst {dimension_numbers = #tpu.dot_dimension_numbers<[1], [0], [0], [1], [0, 0, 1, 1], [], []>} : vector<8x32xf32>, vector<32x128xf32>, vector<8x128xf32> -> vector<8x128xf32>
    %c0_4 = arith.constant 0 : index
    %c0_5 = arith.constant 0 : index
    %4 = vector.load %arg3[%c0_4, %c0_5] : memref<1x128xf32, #tpu.memory_space<vmem>>, vector<1x128xf32>
    %5 = vector.broadcast %4 : vector<1x128xf32> to vector<8x128xf32>
    %6 = arith.addf %3, %5 : vector<8x128xf32>
    %c0_6 = arith.constant 0 : index
    %c0_7 = arith.constant 0 : index
    %7 = vector.load %arg4[%c0_6, %c0_7] : memref<8x128xf32, #tpu.memory_space<vmem>>, vector<8x128xf32>
    tpu.vector_store %arg4[%c0_6, %c0_7], %6 {strides = array<i32>} : memref<8x128xf32, #tpu.memory_space<vmem>>, vector<8x128xf32>,
    return
  }
  func.func @transform_0(%arg0: i32) -> (i32, i32) {
    %c0_i32 = arith.constant 0 : i32
    %c0_i32_0 = arith.constant 0 : i32
    %c0_i32_1 = arith.constant 0 : i32
    return %c0_i32, %c0_i32_0 : i32, i32
  }
  func.func @transform_1(%arg0: i32) -> (i32, i32, i32) {
    %c0_i32 = arith.constant 0 : i32
    %c0_i32_0 = arith.constant 0 : i32
    %c0_i32_1 = arith.constant 0 : i32
    return %arg0, %c0_i32, %c0_i32_0 : i32, i32, i32
  }
  func.func @transform_2(%arg0: i32) -> (i32, i32) {
    %c0_i32 = arith.constant 0 : i32
    %c0_i32_0 = arith.constant 0 : i32
    return %c0_i32, %arg0 : i32, i32
  }
  func.func @transform_3(%arg0: i32) -> (i32, i32) {
    %c0_i32 = arith.constant 0 : i32
    %c0_i32_0 = arith.constant 0 : i32
    return %c0_i32, %arg0 : i32, i32
  }
}

</mosaic_0001>

<llo_original>
// kernel: _hypernet_apply.1
$region0: #{_hypernet_apply.1}
  #allocation0 [shape = 'u32[]', space=smem, size = 0x4, offset = 0x4, fixed_abs, tag = 'smem constant byte address 0x4 - core index']
  #allocation1 [shape = 'u32[144,128]{1,0:T(1,128)}', space=vmem, size = 0x12000, scoped, tag = 'internal scratch']
  %s0 = inlined_call_operand.vmem [shape: f32[8,32], index: 0, kind: input, shape index: {}]
  %s1 = inlined_call_operand.hbm [shape: f32[3,32,128], index: 1, kind: input, shape index: {}]
  %s2 = inlined_call_operand.vmem [shape: f32[1,384], index: 2, kind: input, shape index: {}]
  %s3 = inlined_call_operand.vmem [shape: f32[8,384], index: 3, kind: output, shape index: {}]
  %s4 = sld [smem:[#allocation0]]
  $region49: #{_hypernet_apply.1} parent=0
    _
  %s6 = ssub.s32 1, %s4
  %s7 = scalar_select 0, %s6, %s4
  $region1: #{_hypernet_apply.1} parent=0
    #allocation2 [shape = 'u8[32768]{0}', space=vmem, size = 0x8000, scoped, tag = 'input window, operand 1']
    #allocation3 [shape = 's32[2]{0}', space=sflag, size = 0x8, scoped, tag = 'scoped memory for _hypernet_apply.1']
    %8 = vsyncpa [#allocation3], 0
    %s9 = scalar_lea.sflag [#allocation3], 1
    %10 = vsyncpa %s9, 0
    loop: start=0, step=1, limit=5
    $region2: #{_hypernet_apply.1} parent=1 // loop_pre_header
      _
    $region3: #{_hypernet_apply.1} parent=1 // loop_header
      %s12 = sphi 0, %s16
      %p13 = scmp.ge.s32.totalorder %s12, 5
      %s20 = sphi 0, %s20
      %s22 = sphi 0, %s20
      %s23 = sphi 0, %s22
      %s37 = sphi 0, %s23
      %s43 = sphi 0, %s45
      %s46 = sphi 0, %s43
      %s47 = sphi 0, %s46
      %s63 = sphi 0, %s47
      %s69 = sphi 0, %s71
      %s72 = sphi 0, %s69
      %s73 = sphi 0, %s72
      %s89 = sphi 0, %s73
      %s95 = sphi 0, %s97
      %s98 = sphi 0, %s95
      %s99 = sphi 0, %s98
      %s115 = sphi 0, %s99
    $region4: #{_hypernet_apply.1} parent=1 // loop_header_branch
      %15 = sbr.rel (%p13) target = $region8
    $region5: #{_hypernet_apply.1} parent=1 // loop_body
      %s17 = ssub.s32 %s12, 1
      %s18 = ssub.s32 %s12, 2
      %s19 = sadd.s32 %s12, 1
      %s21 = sadd.s32 %s20, 1
      %p24 = scmp.eq.s32.totalorder %s12, 2
      %p25 = scmp.ne.s32.totalorder %s20, %s22
      %p26 = scmp.eq.s32.totalorder %s12, 0
      %p27 = por %p25, %p26
      %p28 = scmp.ne.s32.totalorder %s20, %s22
      %p29 = scmp.eq.s32.totalorder %s17, 2
      %p30 = por %p28, %p29
      %p31 = scmp.ne.s32.totalorder %s22, %s23
      %p32 = scmp.eq.s32.totalorder %s17, 0
      %p33 = por %p31, %p32
      %p34 = scmp.ne.s32.totalorder %s22, %s23
      %p35 = scmp.eq.s32.totalorder %s18, 2
      %p36 = por %p34, %p35
      %p38 = scmp.ne.s32.totalorder %s23, %s37
      %p39 = scmp.eq.s32.totalorder %s18, 0
      %p40 = por %p38, %p39
      %s41 = ssub.s32 %s12, %s19
      %p42 = scmp.eq.s32.totalorder %s41, 0
      %s44 = sadd.s32 %s43, 1
      %s45 = scalar_select %p42, %s43, %s44
      %p48 = pneg %p42
      %p49 = scmp.eq.s32.totalorder %s12, 2
      %p50 = por %p48, %p49
      %p51 = scmp.ne.s32.totalorder %s43, %s46
      %p52 = scmp.eq.s32.totalorder %s12, 0
      %p53 = por %p51, %p52
      %p54 = scmp.ne.s32.totalorder %s43, %s46
      %p55 = scmp.eq.s32.totalorder %s17, 2
      %p56 = por %p54, %p55
      %p57 = scmp.ne.s32.totalorder %s46, %s47
      %p58 = scmp.eq.s32.totalorder %s17, 0
      %p59 = por %p57, %p58
      %p60 = scmp.ne.s32.totalorder %s46, %s47
      %p61 = scmp.eq.s32.totalorder %s18, 2
      %p62 = por %p60, %p61
      %p64 = scmp.ne.s32.totalorder %s47, %s63
      %p65 = scmp.eq.s32.totalorder %s18, 0
      %p66 = por %p64, %p65
      %s67 = ssub.s32 %s12, %s19
      %p68 = scmp.eq.s32.totalorder %s67, 0
      %s70 = sadd.s32 %s69, 1
      %s71 = scalar_select %p68, %s69, %s70
      %p74 = pneg %p68
      %p75 = scmp.eq.s32.totalorder %s12, 2
      %p76 = por %p74, %p75
      %p77 = scmp.ne.s32.totalorder %s69, %s72
      %p78 = scmp.eq.s32.totalorder %s12, 0
      %p79 = por %p77, %p78
      %p80 = scmp.ne.s32.totalorder %s69, %s72
      %p81 = scmp.eq.s32.totalorder %s17, 2
      %p82 = por %p80, %p81
      %p83 = scmp.ne.s32.totalorder %s72, %s73
      %p84 = scmp.eq.s32.totalorder %s17, 0
      %p85 = por %p83, %p84
      %p86 = scmp.ne.s32.totalorder %s72, %s73
      %p87 = scmp.eq.s32.totalorder %s18, 2
      %p88 = por %p86, %p87
      %p90 = scmp.ne.s32.totalorder %s73, %s89
      %p91 = scmp.eq.s32.totalorder %s18, 0
      %p92 = por %p90, %p91
      %s93 = ssub.s32 %s12, %s19
      %p94 = scmp.eq.s32.totalorder %s93, 0
      %s96 = sadd.s32 %s95, 1
      %s97 = scalar_select %p94, %s95, %s96
      %p100 = pneg %p94
      %p101 = scmp.eq.s32.totalorder %s12, 2
      %p102 = por %p100, %p101
      %p103 = scmp.ne.s32.totalorder %s95, %s98
      %p104 = scmp.eq.s32.totalorder %s12, 0
      %p105 = por %p103, %p104
      %p106 = scmp.ne.s32.totalorder %s95, %s98
      %p107 = scmp.eq.s32.totalorder %s17, 2
      %p108 = por %p106, %p107
      %p109 = scmp.ne.s32.totalorder %s98, %s99
      %p110 = scmp.eq.s32.totalorder %s17, 0
      %p111 = por %p109, %p110
      %p112 = scmp.ne.s32.totalorder %s98, %s99
      %p113 = scmp.eq.s32.totalorder %s18, 2
      %p114 = por %p112, %p113
      %p116 = scmp.ne.s32.totalorder %s99, %s115
      %p117 = scmp.eq.s32.totalorder %s18, 0
      %p118 = por %p116, %p117
      %p119 = scmp.le.s32.totalorder 1, %s12
      %p120 = scmp.lt.s32.totalorder %s12, 4
      %p121 = pnand %p119, %p120
      %p122 = pneg %p121
      // Predicated region
      $region9: #{_hypernet_apply.1} parent=5 // pred_check
        _
      $region10: #{_hypernet_apply.1} parent=5 // pred_check_branch
        %124 = sbr.rel (%p121) target = $region12
      $region11: #{_hypernet_apply.1} parent=5 // pred_region
        %s125 = ssub.s32 %s12, 1
        // Predicated region
        $region13: #{_hypernet_apply.1} parent=11 // pred_check
          %p126 = pneg %p33
        $region14: #{_hypernet_apply.1} parent=11 // pred_check_branch
          %128 = sbr.rel (%p126) target = $region16
        $region15: #{_hypernet_apply.1} parent=11 // pred_region
          _
        $region16: #{_hypernet_apply.1} parent=11 // pred_fallthru
          _
      $region12: #{_hypernet_apply.1} parent=5 // pred_fallthru
        _
      %p129 = scmp.lt.s32.totalorder %s12, 3
      // Predicated region
      $region17: #{_hypernet_apply.1} parent=5 // pred_check
        %p130 = pneg %p129
      $region18: #{_hypernet_apply.1} parent=5 // pred_check_branch
        %132 = sbr.rel (%p130) target = $region20
      $region19: #{_hypernet_apply.1} parent=5 // pred_region
        // Predicated region
        $region21: #{_hypernet_apply.1} parent=19 // pred_check
          %p133 = pneg %p53
        $region22: #{_hypernet_apply.1} parent=19 // pred_check_branch
          %135 = sbr.rel (%p133) target = $region24
        $region23: #{_hypernet_apply.1} parent=19 // pred_region
          %s136 = sand.u32 %s43, 1
          %s137 = scalar_lea.sflag [#allocation3], %s136
          %s138 = sand.u32 %s43, 1
          %s139 = smul.addr %s138, 32
          %s140 = scalar_lea.vmem [#allocation2], %s139
          %s142 = ssub.s32 512, 512
          %143 = vsyncadd %s137, %s142
          %s144 = smul.addr %s12, 4
          %s145 = smul.addr %s144, 128
          %s146 = scalar_lea.hbm %s1, %s145
          %s147 = sshll.u32 %s140, 4
          %s148 = int_to_ptr.vmem [resolvable:$true] %s147
          %153 = dma.hbm_to_vmem [thread:$0]  %s146, 512, %s148, %s137, 128, 128, 8
        $region24: #{_hypernet_apply.1} parent=19 // pred_fallthru
          _
        // Predicated region
        $region25: #{_hypernet_apply.1} parent=19 // pred_check
          %p154 = pneg %p79
        $region26: #{_hypernet_apply.1} parent=19 // pred_check_branch
          %156 = sbr.rel (%p154) target = $region28
        $region27: #{_hypernet_apply.1} parent=19 // pred_region
          %p157 = scmp.lt.s32.totalorder %s12, 2
          %s158 = scalar_select %p157, %s12, 2
          %s159 = scalar_lea.vmem %s2, %s158
        $region28: #{_hypernet_apply.1} parent=19 // pred_fallthru
          _
      $region20: #{_hypernet_apply.1} parent=5 // pred_fallthru
        _
      %p160 = scmp.le.s32.totalorder 1, %s12
      %p161 = scmp.lt.s32.totalorder %s12, 4
      %p162 = pnand %p160, %p161
      %p163 = pneg %p162
      // Predicated region
      $region29: #{_hypernet_apply.1} parent=5 // pred_check
        _
      $region30: #{_hypernet_apply.1} parent=5 // pred_check_branch
        %165 = sbr.rel (%p162) target = $region32
      $region31: #{_hypernet_apply.1} parent=5 // pred_region
        %s166 = ssub.s32 %s12, 1
        %s167 = sand.u32 %s46, 1
        %s168 = scalar_lea.sflag [#allocation3], %s167
        %s169 = sand.u32 %s46, 1
        %s170 = smul.addr %s169, 32
        %s171 = scalar_lea.vmem [#allocation2], %s170
        // Predicated region
        $region33: #{_hypernet_apply.1} parent=31 // pred_check
          %p172 = pneg %p59
        $region34: #{_hypernet_apply.1} parent=31 // pred_check_branch
          %174 = sbr.rel (%p172) target = $region36
        $region35: #{_hypernet_apply.1} parent=31 // pred_region
          %175 = dma.done %s168, 512
        $region36: #{_hypernet_apply.1} parent=31 // pred_fallthru
          _
        %p176 = pneg %p33
        %p177 = pneg %p30
        %s178 = sand.u32 %s46, 1
        %s179 = scalar_lea.sflag [#allocation3], %s178
        %s180 = sand.u32 %s46, 1
        %s181 = smul.addr %s180, 32
        %s182 = scalar_lea.vmem [#allocation2], %s181
        %p183 = pneg %p59
        %p184 = pneg %p56
        %p185 = scmp.lt.s32.totalorder %s17, 2
        %s186 = scalar_select %p185, %s17, 2
        %s187 = scalar_lea.vmem %s2, %s186
        %p188 = pneg %p85
        %p189 = pneg %p82
        %p190 = pneg %p111
        %p191 = pneg %p108
        %p192 = scmp.lt.s32.totalorder %s17, 2
        %s193 = scalar_select %p192, %s17, 2
        %s194 = smul.addr %s193, 8
        %s195 = scalar_lea.vmem %s3, %s194
        %p196 = scmp.lt.s32.totalorder %s17, 2
        %s197 = scalar_select %p196, %s17, 2
        %s198 = scalar_lea.vmem %s2, %s197
        %p199 = scmp.lt.s32.totalorder %s17, 2
        %s200 = scalar_select %p199, %s17, 2
        %s201 = smul.addr %s200, 8
        %s202 = scalar_lea.vmem %s3, %s201
        %v203 = vld [vmem:[%s0] sm:$0xff]
        %v204 = vld [vmem:[%s171] sm:$0xff]
        %v205 = vld [vmem:[%s171 + $0x8] sm:$0xff]
        %v206 = vld [vmem:[%s171 + $0x10] sm:$0xff]
        %v207 = vld [vmem:[%s171 + $0x18] sm:$0xff]
        %v208 = vld [vmem:[%s198] sm:$0x1]
        %v210 = vlaneseq
        %v211 = vshrl.u32 %v210, 7
        %v212 = vsub.s32 0, %v211
        %v213 = vrot.slane %v208, %v212
        %vm215 = vcmask 261120
        %v217 = vsel %vm215, %v203, 0
        %219 = vmatprep.subr.mxu0 0.0
        %220 = vmatpush1.msra.mxu0 %v204
        %221 = vmatprep.subr.mxu0 0.0
        %222 = vmatpush1.msra.mxu0 %v205
        %223 = vmatprep.subr.mxu0 0.0
        %224 = vmatpush1.msra.mxu0 %v206
        %225 = vmatprep.subr.mxu0 0.0
        %226 = vmatpush1.msra.mxu0 %v207
        %227 = vmatprep.subr.mxu0 0.0
        %228 = vmatpush1.msra.mxu0 0.0
        %229 = vmatprep.subr.mxu0 0.0
        %230 = vmatpush1.msra.mxu0 0.0
        %231 = vmatprep.subr.mxu0 0.0
        %232 = vmatpush1.msra.mxu0 0.0
        %233 = vmatprep.subr.mxu0 0.0
        %234 = vmatpush1.msra.mxu0 0.0
        %235 = vmatprep.subr.mxu0 0.0
        %236 = vmatpush1.msra.mxu0 0.0
        %237 = vmatprep.subr.mxu0 0.0
        %238 = vmatpush1.msra.mxu0 0.0
        %239 = vmatprep.subr.mxu0 0.0
        %240 = vmatpush1.msra.mxu0 0.0
        %241 = vmatprep.subr.mxu0 0.0
        %242 = vmatpush1.msra.mxu0 0.0
        %243 = vmatprep.subr.mxu0 0.0
        %244 = vmatpush1.msra.mxu0 0.0
        %245 = vmatprep.subr.mxu0 0.0
        %246 = vmatpush1.msra.mxu0 0.0
        %247 = vmatprep.subr.mxu0 0.0
        %248 = vmatpush1.msra.mxu0 0.0
        %249 = vmatprep.subr.mxu0 0.0
        %250 = vmatpush1.msra.mxu0 0.0
        %251 = vmatprep.subr.mxu0 0.0
        %252 = vmatpush1.msra.mxu0 0.0
        %253 = vmatprep.subr.mxu0 0.0
        %254 = vmatpush1.msra.mxu0 0.0
        %255 = vmatprep.subr.mxu0 0.0
        %256 = vmatpush1.msra.mxu0 0.0
        %257 = vmatprep.subr.mxu0 0.0
        %258 = vmatpush1.msra.mxu0 0.0
        %259 = vmatprep.subr.mxu0 0.0
        %260 = vmatpush1.msra.mxu0 0.0
        %261 = vmatprep.subr.mxu0 0.0
        %262 = vmatpush1.msra.mxu0 0.0
        %263 = vmatprep.subr.mxu0 0.0
        %264 = vmatpush1.msra.mxu0 0.0
        %265 = vmatprep.subr.mxu0 0.0
        %266 = vmatpush1.msra.mxu0 0.0
        %267 = vmatprep.subr.mxu0 0.0
        %268 = vmatpush1.msra.mxu0 0.0
        %269 = vmatprep.subr.mxu0 0.0
        %270 = vmatpush1.msra.mxu0 0.0
        %271 = vmatprep.subr.mxu0 0.0
        %272 = vmatpush1.msra.mxu0 0.0
        %273 = vmatprep.subr.mxu0 0.0
        %274 = vmatpush1.msra.mxu0 0.0
        %275 = vmatprep.subr.mxu0 0.0
        %276 = vmatpush1.msra.mxu0 0.0
        %277 = vmatprep.subr.mxu0 0.0
        %278 = vmatpush1.msra.mxu0 0.0
        %279 = vmatprep.subr.mxu0 0.0
        %280 = vmatpush1.msra.mxu0 0.0
        %281 = vmatprep.subr.mxu0 0.0
        %282 = vmatpush1.msra.mxu0 0.0
        %283 = vmatprep.mubr.f32.mxu0 0.0
        %284 = vmatmul.mubr.f32.gmra.mrb[0].mxu0 %v217
        %v285 = vpop.f32.mrb[0].mxu0
        %v286 = vadd.f32 %v213, %v285
        %v287 = vpop.f32.mrb[0].mxu0
        %288 = vdwg.mxu0
        %289 = vst [vmem:[%s202] sm:$0xff] %v286
        %p290 = scmp.lt.s32.totalorder %s17, 2
        %s291 = scalar_select %p290, %s17, 2
        %s292 = smul.addr %s291, 8
        %s293 = scalar_lea.vmem %s3, %s292
        // Predicated region
        $region37: #{_hypernet_apply.1} parent=31 // pred_check
          %p294 = pneg %p108
        $region38: #{_hypernet_apply.1} parent=31 // pred_check_branch
          %296 = sbr.rel (%p294) target = $region40
        $region39: #{_hypernet_apply.1} parent=31 // pred_region
          _
        $region40: #{_hypernet_apply.1} parent=31 // pred_fallthru
          _
      $region32: #{_hypernet_apply.1} parent=5 // pred_fallthru
        _
      %p297 = scmp.le.s32.totalorder 2, %s12
      // Predicated region
      $region41: #{_hypernet_apply.1} parent=5 // pred_check
        %p298 = pneg %p297
      $region42: #{_hypernet_apply.1} parent=5 // pred_check_branch
        %300 = sbr.rel (%p298) target = $region44
      $region43: #{_hypernet_apply.1} parent=5 // pred_region
        %s301 = ssub.s32 %s12, 2
        // Predicated region
        $region45: #{_hypernet_apply.1} parent=43 // pred_check
          %p302 = pneg %p114
        $region46: #{_hypernet_apply.1} parent=43 // pred_check_branch
          %304 = sbr.rel (%p302) target = $region48
        $region47: #{_hypernet_apply.1} parent=43 // pred_region
          %p305 = scmp.lt.s32.totalorder %s18, 2
          %s306 = scalar_select %p305, %s18, 2
          %s307 = smul.addr %s306, 8
          %s308 = scalar_lea.vmem %s3, %s307
        $region48: #{_hypernet_apply.1} parent=43 // pred_fallthru
          _
      $region44: #{_hypernet_apply.1} parent=5 // pred_fallthru
        _
    $region6: #{_hypernet_apply.1} parent=1 // loop_footer
      %s16 = sadd.s32 1, %s12
    $region7: #{_hypernet_apply.1} parent=1 // loop_footer_branch
      %11 = sbr.rel target = $region3
    $region8: #{_hypernet_apply.1} parent=1 // loop_exit
      _
    %309 = vsyncpa [#allocation3], 1
    %s310 = scalar_lea.sflag [#allocation3], 1
    %311 = vsyncpa %s310, 1

</llo_original>
